<compile_context>
chip_gen: v7x
topology: tpu7x:2x2x1
jax: 0.10.0
libtpu: 0.0.40
codegen_flags: <defaults>
</compile_context>

<pallas_src>
import functools

import jax
import jax.numpy as jnp
from jax.experimental import pallas as pl
from jax.experimental.pallas import tpu as pltpu


def _refine_loss_kernel(*refs, L, neg_alpha_inv_bce, beta_inv_l1):
    # refs = (cls_target, points_target, logits_0..L-1, points_0..L-1,
    #         out, bce_acc, l1_acc)
    target_ref = refs[0]
    pt_ref = refs[1]
    logit_refs = refs[2:2 + L]
    pts_refs = refs[2 + L:2 + 2 * L]
    out_ref = refs[2 + 2 * L]
    bce_acc = refs[2 + 2 * L + 1]      # (8, C)  f32 running partial
    l1_acc = refs[2 + 2 * L + 2]       # (8, Dp) f32 running partial

    i = pl.program_id(1)               # reduction axis (axis 0 = TC split)

    @pl.when(i == 0)
    def _():
        bce_acc[...] = jnp.zeros_like(bce_acc)
        l1_acc[...] = jnp.zeros_like(l1_acc)

    # Per-sample class-balancing weights, shared by all L list entries.
    # NOTE: assumes binary {0,1} targets, exactly as the PyTorch module does.
    tar = target_ref[...].astype(jnp.float32)                  # (tn, C)
    tn, c = tar.shape
    w_pos = jnp.sum(tar, axis=1, keepdims=True) * (1.0 / c)    # used where t==0
    is_one = tar == 1.0
    w_sel = jnp.where(is_one, 1.0 - w_pos, w_pos)              # (tn, C)

    pt = pt_ref[...].astype(jnp.float32)                       # (Rp, Dp)
    rp, dp = pt.shape

    bce_part = jnp.zeros(bce_acc.shape, jnp.float32)
    l1_part = jnp.zeros(l1_acc.shape, jnp.float32)
    for l in range(L):                                         # static, small L
        x = logit_refs[l][...].astype(jnp.float32)             # (tn, C)
        # Binary targets -> only one of log(p)/log(1-p) is used per element:
        #   t==1 -> log(sigmoid(x));  t==0 -> log(1-sigmoid(x)) = log(sigmoid(-x))
        # Stable log-sigmoid (exp + log1p: 2 EUP ops instead of sigmoid+log's 3),
        # clamped at -100 like torch.nn.functional.binary_cross_entropy.
        z = jnp.where(is_one, x, -x)
        log_sig = -(jnp.maximum(-z, 0.0) + jnp.log1p(jnp.exp(-jnp.abs(z))))
        log_sel = jnp.maximum(log_sig, -100.0)
        terms = w_sel * log_sel                 # negation folded into constant
        # (tn, C) -> (tn//8, 8, C) is layout-preserving; axis-0 sum = pure VALU.
        bce_part = bce_part + terms.reshape(tn // 8, 8, c).sum(axis=0)

        pp = pts_refs[l][...].astype(jnp.float32)              # (Rp, Dp)
        diff = jnp.abs(pp - pt)
        l1_part = l1_part + diff.reshape(rp // 8, 8, dp).sum(axis=0)

    bce_acc[...] = bce_acc[...] + bce_part
    l1_acc[...] = l1_acc[...] + l1_part

    # Single cross-lane (XLU) reduction, only on the last step of this split.
    @pl.when(i == pl.num_programs(1) - 1)
    def _():
        total = (neg_alpha_inv_bce * jnp.sum(bce_acc[...])
                 + beta_inv_l1 * jnp.sum(l1_acc[...]))
        out_ref[...] = total.reshape(1, 1, 1)


def _row_multiple(dtype):
    """Sublane-packing row multiple: 8 for 4-byte, 16 for 2-byte, 32 for 1-byte."""
    return 8 * max(1, 4 // jnp.dtype(dtype).itemsize)


def _pick_tiling(n, preferred, row_mult, num_splits):
    """Return (tile_rows, padded_n) with padded_n % (num_splits*tile_rows) == 0."""
    pref = max(row_mult, (preferred // row_mult) * row_mult)
    unit = num_splits * row_mult
    n_min = -(-n // unit) * unit                  # minimal legal padded extent
    if n_min // num_splits <= pref:
        return n_min // num_splits, n_min         # one tile per split, minimal pad
    # Prefer a tile near `preferred` for which (num_splits*tn) divides n exactly
    # (no padding copy); otherwise take `pref` and zero-pad up.
    tn = pref
    for cand in range(pref, max(row_mult, pref // 2) - 1, -row_mult):
        if n % (num_splits * cand) == 0:
            tn = cand
            break
    n_pad = -(-n // (num_splits * tn)) * (num_splits * tn)
    return tn, n_pad


def _pad_rows(x, n_pad):
    n = x.shape[0]
    if n == n_pad:
        return x
    return jnp.pad(x, [(0, n_pad - n)] + [(0, 0)] * (x.ndim - 1))


def refine_loss(use_for_cls_losses, cls_target, points_preds, points_target,
                alpha=1.0, beta=1.0, block_n=1024):
    """use_for_cls_losses: list of (N, C); cls_target: (N, C) with 0/1 entries;
    points_preds: list of (N, M, 3); points_target: (N, M, 3).
    Inputs may be any float dtype; math is done in f32 inside the kernel."""
    L = len(use_for_cls_losses)
    N, C = use_for_cls_losses[0].shape
    M = points_target.shape[1]
    PD = M * 3

    NUM_SPLITS = 2   # leading "parallel" grid axis -> both TensorCores on v7x

    row_mult = max([_row_multiple(cls_target.dtype),
                    _row_multiple(points_target.dtype)]
                   + [_row_multiple(a.dtype) for a in use_for_cls_losses]
                   + [_row_multiple(p.dtype) for p in points_preds])
    tn, n_pad = _pick_tiling(N, block_n, row_mult, NUM_SPLITS)
    T = n_pad // (NUM_SPLITS * tn)               # tiles per split

    # Zero-padded rows contribute exactly 0 to both sums (zero target rows give
    # w==0; zero point rows give |0-0|==0), so the means still divide by N.
    target_p = _pad_rows(cls_target, n_pad)
    logits_p = [_pad_rows(x, n_pad) for x in use_for_cls_losses]

    # Lane-dense points stream when each tile's element count tiles (8,128)
    # exactly: fully packed vregs / unmasked vector ops on the L1 path.
    lane_dense = (tn * PD) % 1024 == 0
    if lane_dense:
        pts_rows, pts_cols = tn * PD // 128, 128
        prep_pts = lambda p: _pad_rows(p.reshape(N, PD), n_pad).reshape(-1, 128)
    else:
        pts_rows, pts_cols = tn, PD
        prep_pts = lambda p: _pad_rows(p.reshape(N, PD), n_pad)
    pt_p = prep_pts(points_target)
    pts_p = [prep_pts(p) for p in points_preds]

    kernel = functools.partial(
        _refine_loss_kernel, L=L,
        neg_alpha_inv_bce=-float(alpha) / float(L * N * C),
        beta_inv_l1=float(beta) / float(L * N * PD))

    row_map = lambda p, i: (p * T + i, 0)
    in_specs = ([pl.BlockSpec((tn, C), row_map),
                 pl.BlockSpec((pts_rows, pts_cols), row_map)]
                + [pl.BlockSpec((tn, C), row_map) for _ in range(L)]
                + [pl.BlockSpec((pts_rows, pts_cols), row_map) for _ in range(L)])

    # Double-buffered per-step VMEM footprint; bump the scoped limit only if
    # needed and stay well inside v7x's 64 MiB physical VMEM (v5e/v6e: 128 MiB).
    blk_bytes = (tn * C * (target_p.dtype.itemsize
                           + sum(x.dtype.itemsize for x in logits_p))
                 + pts_rows * pts_cols * (pt_p.dtype.itemsize
                                          + sum(p.dtype.itemsize for p in pts_p)))
    est_vmem = 2 * blk_bytes + 2 * 8 * (C + pts_cols) * 4
    vmem_limit = None
    if est_vmem * 1.3 > 32 * 2**20:
        vmem_limit = int(min(est_vmem * 1.3, 56 * 2**20))

    all_inputs = [target_p, pt_p, *logits_p, *pts_p]
    cost = pl.CostEstimate(
        flops=L * n_pad * (10 * C + 3 * PD),
        transcendentals=2 * L * n_pad * C,
        bytes_accessed=sum(x.size * x.dtype.itemsize for x in all_inputs)
        + 4 * NUM_SPLITS)

    grid_spec = pltpu.PrefetchScalarGridSpec(
        num_scalar_prefetch=0,
        grid=(NUM_SPLITS, T),
        in_specs=in_specs,
        out_specs=pl.BlockSpec((1, 1, 1), lambda p, i: (p, 0, 0)),
        scratch_shapes=[pltpu.VMEM((8, C), jnp.float32),          # BCE partials
                        pltpu.VMEM((8, pts_cols), jnp.float32)],  # L1 partials
    )

    out = pl.pallas_call(
        kernel,
        out_shape=jax.ShapeDtypeStruct((NUM_SPLITS, 1, 1), jnp.float32),
        grid_spec=grid_spec,
        compiler_params=pltpu.CompilerParams(
            dimension_semantics=("parallel", "arbitrary"),
            vmem_limit_bytes=vmem_limit),
        cost_estimate=cost,
    )(*all_inputs)
    return jnp.sum(out)   # combine the two per-core partials


def _refine_loss_ref(use_for_cls_losses, cls_target, points_preds,
                     points_target, alpha=1.0, beta=1.0):
    """Pure-JAX reference mirroring the PyTorch module (for validation)."""
    target = cls_target.astype(jnp.float32)
    N, C = target.shape
    w_pos = jnp.sum(target, axis=1, keepdims=True) / C
    w_neg = jnp.sum(1.0 - target, axis=1, keepdims=True) / C
    w = jnp.where(target == 1.0, w_neg, w_pos)

    total = 0.0
    for logits, pp in zip(use_for_cls_losses, points_preds):
        p = jax.nn.sigmoid(logits.astype(jnp.float32))
        log_p = jnp.maximum(jnp.log(p), -100.0)
        log_1mp = jnp.maximum(jnp.log(1.0 - p), -100.0)
        bce = -(w * (target * log_p + (1.0 - target) * log_1mp))
        cls_loss = jnp.mean(jnp.mean(bce, axis=1))
        reg_loss = jnp.mean(jnp.abs(pp.astype(jnp.float32)
                                    - points_target.astype(jnp.float32)))
        total = total + alpha * cls_loss + beta * reg_loss
    return total / len(use_for_cls_losses)


if __name__ == "__main__":
    key = jax.random.PRNGKey(0)
    # N samples, C correspondences (lane-dense last dim), M points per sample.
    L, N, C, M = 3, 64, 128, 32
    alpha, beta = 0.7, 1.3

    keys = jax.random.split(key, 2 * L + 2)
    use_for_cls_losses = [jax.random.normal(keys[i], (N, C), jnp.float32)
                          for i in range(L)]
    cls_target = (jax.random.uniform(keys[L], (N, C)) > 0.5).astype(jnp.float32)
    points_preds = [jax.random.normal(keys[L + 1 + i], (N, M, 3), jnp.float32)
                    for i in range(L)]
    points_target = jax.random.normal(keys[2 * L + 1], (N, M, 3), jnp.float32)

    ref = _refine_loss_ref(use_for_cls_losses, cls_target, points_preds,
                           points_target, alpha=alpha, beta=beta)

    # block_n=8  -> grid (2,4): exercises the multi-step accumulation path.
    # block_n=32 -> grid (2,1): exercises the lane-dense points path.
    # default    -> production tiling.
    for bn in (8, 32, 1024):
        out = refine_loss(use_for_cls_losses, cls_target, points_preds,
                          points_target, alpha=alpha, beta=beta, block_n=bn)
        out = jax.block_until_ready(out)
        assert jnp.allclose(out, ref, rtol=1e-5, atol=1e-5), (bn, out, ref)

    print("KERNEL_OK")
</pallas_src>

<mosaic_0001>
module attributes {stable_mosaic.version = 11 : i64} {
  func.func @_refine_loss_kernel(%arg0: i32, %arg1: i32, %arg2: memref<8x128xf32, #tpu.memory_space<vmem>>, %arg3: memref<8x96xf32, #tpu.memory_space<vmem>>, %arg4: memref<8x128xf32, #tpu.memory_space<vmem>>, %arg5: memref<8x128xf32, #tpu.memory_space<vmem>>, %arg6: memref<8x128xf32, #tpu.memory_space<vmem>>, %arg7: memref<8x96xf32, #tpu.memory_space<vmem>>, %arg8: memref<8x96xf32, #tpu.memory_space<vmem>>, %arg9: memref<8x96xf32, #tpu.memory_space<vmem>>, %arg10: memref<1x1x1xf32, #tpu.memory_space<vmem>>, %arg11: memref<8x128xf32, #tpu.memory_space<vmem>>, %arg12: memref<8x96xf32, #tpu.memory_space<vmem>>) attributes {dimension_semantics = [#tpu.dimension_semantics<parallel>, #tpu.dimension_semantics<arbitrary>], iteration_bounds = array<i64: 2, 4>, scalar_prefetch = 0 : i64, scratch_operands = 2 : i64, tpu.core_type = #tpu.core_type<tc>, window_params = [{transform_indices = @transform_0, window_bounds = array<i64: 8, 128>}, {transform_indices = @transform_1, window_bounds = array<i64: 8, 96>}, {transform_indices = @transform_2, window_bounds = array<i64: 8, 128>}, {transform_indices = @transform_3, window_bounds = array<i64: 8, 128>}, {transform_indices = @transform_4, window_bounds = array<i64: 8, 128>}, {transform_indices = @transform_5, window_bounds = array<i64: 8, 96>}, {transform_indices = @transform_6, window_bounds = array<i64: 8, 96>}, {transform_indices = @transform_7, window_bounds = array<i64: 8, 96>}, {transform_indices = @transform_8, window_bounds = array<i64: 1, 1, 1>}]} {
    %c0_i32 = arith.constant 0 : i32
    %0 = arith.cmpi eq, %arg1, %c0_i32 : i32
    %1 = arith.extui %0 : i1 to i32
    %c0_i32_0 = arith.constant 0 : i32
    %2 = arith.cmpi ne, %1, %c0_i32_0 : i32
    scf.if %2 {
      %cst_54 = arith.constant 0.000000e+00 : f32
      %113 = vector.broadcast %cst_54 : f32 to vector<8x128xf32>
      %c0_55 = arith.constant 0 : index
      %c0_56 = arith.constant 0 : index
      %114 = vector.load %arg11[%c0_55, %c0_56] : memref<8x128xf32, #tpu.memory_space<vmem>>, vector<8x128xf32>
      tpu.vector_store %arg11[%c0_55, %c0_56], %113 {strides = array<i32>} : memref<8x128xf32, #tpu.memory_space<vmem>>, vector<8x128xf32>,
      %cst_57 = arith.constant 0.000000e+00 : f32
      %115 = vector.broadcast %cst_57 : f32 to vector<8x96xf32>
      %c0_58 = arith.constant 0 : index
      %c0_59 = arith.constant 0 : index
      %116 = vector.load %arg12[%c0_58, %c0_59] : memref<8x96xf32, #tpu.memory_space<vmem>>, vector<8x96xf32>
      tpu.vector_store %arg12[%c0_58, %c0_59], %115 {strides = array<i32>} : memref<8x96xf32, #tpu.memory_space<vmem>>, vector<8x96xf32>,
    } else {
    }
    %c0 = arith.constant 0 : index
    %c0_1 = arith.constant 0 : index
    %3 = vector.load %arg2[%c0, %c0_1] : memref<8x128xf32, #tpu.memory_space<vmem>>, vector<8x128xf32>
    %cst = arith.constant dense<0.000000e+00> : vector<8xf32>
    %4 = vector.multi_reduction <add>, %3, %cst [1] : vector<8x128xf32> to vector<8xf32>
    %5 = vector.shape_cast %4 : vector<8xf32> to vector<8x1xf32>
    %cst_2 = arith.constant 7.812500e-03 : f32
    %6 = vector.broadcast %cst_2 : f32 to vector<8x1xf32>
    %7 = arith.mulf %5, %6 : vector<8x1xf32>
    %cst_3 = arith.constant 1.000000e+00 : f32
    %8 = vector.broadcast %cst_3 : f32 to vector<8x128xf32>
    %9 = arith.cmpf oeq, %3, %8 : vector<8x128xf32>
    %cst_4 = arith.constant 1.000000e+00 : f32
    %10 = vector.broadcast %cst_4 : f32 to vector<8x1xf32>
    %11 = arith.subf %10, %7 : vector<8x1xf32>
    %12 = vector.shape_cast %11 : vector<8x1xf32> to vector<8x1xf32>
    %13 = vector.broadcast %12 : vector<8x1xf32> to vector<8x128xf32>
    %14 = vector.shape_cast %7 : vector<8x1xf32> to vector<8x1xf32>
    %15 = vector.broadcast %14 : vector<8x1xf32> to vector<8x128xf32>
    %16 = arith.select %9, %13, %15 : vector<8x128xi1>, vector<8x128xf32>
    %c0_5 = arith.constant 0 : index
    %c0_6 = arith.constant 0 : index
    %17 = vector.load %arg3[%c0_5, %c0_6] : memref<8x96xf32, #tpu.memory_space<vmem>>, vector<8x96xf32>
    %cst_7 = arith.constant 0.000000e+00 : f32
    %18 = vector.broadcast %cst_7 : f32 to vector<8x128xf32>
    %cst_8 = arith.constant 0.000000e+00 : f32
    %19 = vector.broadcast %cst_8 : f32 to vector<8x96xf32>
    %c0_9 = arith.constant 0 : index
    %c0_10 = arith.constant 0 : index
    %20 = vector.load %arg4[%c0_9, %c0_10] : memref<8x128xf32, #tpu.memory_space<vmem>>, vector<8x128xf32>
    %cst_11 = arith.constant 0.000000e+00 : f32
    %21 = vector.broadcast %cst_11 : f32 to vector<8x128xf32>
    %22 = arith.subf %21, %20 : vector<8x128xf32>
    %23 = arith.select %9, %20, %22 : vector<8x128xi1>, vector<8x128xf32>
    %cst_12 = arith.constant 0.000000e+00 : f32
    %24 = vector.broadcast %cst_12 : f32 to vector<8x128xf32>
    %25 = arith.subf %24, %23 : vector<8x128xf32>
    %cst_13 = arith.constant 0.000000e+00 : f32
    %26 = vector.broadcast %cst_13 : f32 to vector<8x128xf32>
    %27 = arith.maximumf %25, %26 : vector<8x128xf32>
    %28 = math.absf %23 : vector<8x128xf32>
    %cst_14 = arith.constant 0.000000e+00 : f32
    %29 = vector.broadcast %cst_14 : f32 to vector<8x128xf32>
    %30 = arith.subf %29, %28 : vector<8x128xf32>
    %31 = math.exp %30 : vector<8x128xf32>
    %32 = math.log1p %31 : vector<8x128xf32>
    %33 = arith.addf %27, %32 : vector<8x128xf32>
    %cst_15 = arith.constant 0.000000e+00 : f32
    %34 = vector.broadcast %cst_15 : f32 to vector<8x128xf32>
    %35 = arith.subf %34, %33 : vector<8x128xf32>
    %cst_16 = arith.constant -1.000000e+02 : f32
    %36 = vector.broadcast %cst_16 : f32 to vector<8x128xf32>
    %37 = arith.maximumf %35, %36 : vector<8x128xf32>
    %38 = arith.mulf %16, %37 : vector<8x128xf32>
    %39 = vector.shape_cast %38 : vector<8x128xf32> to vector<1x8x128xf32>
    %cst_17 = arith.constant dense<0.000000e+00> : vector<8x128xf32>
    %40 = vector.multi_reduction <add>, %39, %cst_17 [0] : vector<1x8x128xf32> to vector<8x128xf32>
    %41 = arith.addf %18, %40 : vector<8x128xf32>
    %c0_18 = arith.constant 0 : index
    %c0_19 = arith.constant 0 : index
    %42 = vector.load %arg7[%c0_18, %c0_19] : memref<8x96xf32, #tpu.memory_space<vmem>>, vector<8x96xf32>
    %43 = arith.subf %42, %17 : vector<8x96xf32>
    %44 = math.absf %43 : vector<8x96xf32>
    %45 = vector.shape_cast %44 : vector<8x96xf32> to vector<1x8x96xf32>
    %cst_20 = arith.constant dense<0.000000e+00> : vector<8x96xf32>
    %46 = vector.multi_reduction <add>, %45, %cst_20 [0] : vector<1x8x96xf32> to vector<8x96xf32>
    %47 = arith.addf %19, %46 : vector<8x96xf32>
    %c0_21 = arith.constant 0 : index
    %c0_22 = arith.constant 0 : index
    %48 = vector.load %arg5[%c0_21, %c0_22] : memref<8x128xf32, #tpu.memory_space<vmem>>, vector<8x128xf32>
    %cst_23 = arith.constant 0.000000e+00 : f32
    %49 = vector.broadcast %cst_23 : f32 to vector<8x128xf32>
    %50 = arith.subf %49, %48 : vector<8x128xf32>
    %51 = arith.select %9, %48, %50 : vector<8x128xi1>, vector<8x128xf32>
    %cst_24 = arith.constant 0.000000e+00 : f32
    %52 = vector.broadcast %cst_24 : f32 to vector<8x128xf32>
    %53 = arith.subf %52, %51 : vector<8x128xf32>
    %cst_25 = arith.constant 0.000000e+00 : f32
    %54 = vector.broadcast %cst_25 : f32 to vector<8x128xf32>
    %55 = arith.maximumf %53, %54 : vector<8x128xf32>
    %56 = math.absf %51 : vector<8x128xf32>
    %cst_26 = arith.constant 0.000000e+00 : f32
    %57 = vector.broadcast %cst_26 : f32 to vector<8x128xf32>
    %58 = arith.subf %57, %56 : vector<8x128xf32>
    %59 = math.exp %58 : vector<8x128xf32>
    %60 = math.log1p %59 : vector<8x128xf32>
    %61 = arith.addf %55, %60 : vector<8x128xf32>
    %cst_27 = arith.constant 0.000000e+00 : f32
    %62 = vector.broadcast %cst_27 : f32 to vector<8x128xf32>
    %63 = arith.subf %62, %61 : vector<8x128xf32>
    %cst_28 = arith.constant -1.000000e+02 : f32
    %64 = vector.broadcast %cst_28 : f32 to vector<8x128xf32>
    %65 = arith.maximumf %63, %64 : vector<8x128xf32>
    %66 = arith.mulf %16, %65 : vector<8x128xf32>
    %67 = vector.shape_cast %66 : vector<8x128xf32> to vector<1x8x128xf32>
    %cst_29 = arith.constant dense<0.000000e+00> : vector<8x128xf32>
    %68 = vector.multi_reduction <add>, %67, %cst_29 [0] : vector<1x8x128xf32> to vector<8x128xf32>
    %69 = arith.addf %41, %68 : vector<8x128xf32>
    %c0_30 = arith.constant 0 : index
    %c0_31 = arith.constant 0 : index
    %70 = vector.load %arg8[%c0_30, %c0_31] : memref<8x96xf32, #tpu.memory_space<vmem>>, vector<8x96xf32>
    %71 = arith.subf %70, %17 : vector<8x96xf32>
    %72 = math.absf %71 : vector<8x96xf32>
    %73 = vector.shape_cast %72 : vector<8x96xf32> to vector<1x8x96xf32>
    %cst_32 = arith.constant dense<0.000000e+00> : vector<8x96xf32>
    %74 = vector.multi_reduction <add>, %73, %cst_32 [0] : vector<1x8x96xf32> to vector<8x96xf32>
    %75 = arith.addf %47, %74 : vector<8x96xf32>
    %c0_33 = arith.constant 0 : index
    %c0_34 = arith.constant 0 : index
    %76 = vector.load %arg6[%c0_33, %c0_34] : memref<8x128xf32, #tpu.memory_space<vmem>>, vector<8x128xf32>
    %cst_35 = arith.constant 0.000000e+00 : f32
    %77 = vector.broadcast %cst_35 : f32 to vector<8x128xf32>
    %78 = arith.subf %77, %76 : vector<8x128xf32>
    %79 = arith.select %9, %76, %78 : vector<8x128xi1>, vector<8x128xf32>
    %cst_36 = arith.constant 0.000000e+00 : f32
    %80 = vector.broadcast %cst_36 : f32 to vector<8x128xf32>
    %81 = arith.subf %80, %79 : vector<8x128xf32>
    %cst_37 = arith.constant 0.000000e+00 : f32
    %82 = vector.broadcast %cst_37 : f32 to vector<8x128xf32>
    %83 = arith.maximumf %81, %82 : vector<8x128xf32>
    %84 = math.absf %79 : vector<8x128xf32>
    %cst_38 = arith.constant 0.000000e+00 : f32
    %85 = vector.broadcast %cst_38 : f32 to vector<8x128xf32>
    %86 = arith.subf %85, %84 : vector<8x128xf32>
    %87 = math.exp %86 : vector<8x128xf32>
    %88 = math.log1p %87 : vector<8x128xf32>
    %89 = arith.addf %83, %88 : vector<8x128xf32>
    %cst_39 = arith.constant 0.000000e+00 : f32
    %90 = vector.broadcast %cst_39 : f32 to vector<8x128xf32>
    %91 = arith.subf %90, %89 : vector<8x128xf32>
    %cst_40 = arith.constant -1.000000e+02 : f32
    %92 = vector.broadcast %cst_40 : f32 to vector<8x128xf32>
    %93 = arith.maximumf %91, %92 : vector<8x128xf32>
    %94 = arith.mulf %16, %93 : vector<8x128xf32>
    %95 = vector.shape_cast %94 : vector<8x128xf32> to vector<1x8x128xf32>
    %cst_41 = arith.constant dense<0.000000e+00> : vector<8x128xf32>
    %96 = vector.multi_reduction <add>, %95, %cst_41 [0] : vector<1x8x128xf32> to vector<8x128xf32>
    %97 = arith.addf %69, %96 : vector<8x128xf32>
    %c0_42 = arith.constant 0 : index
    %c0_43 = arith.constant 0 : index
    %98 = vector.load %arg9[%c0_42, %c0_43] : memref<8x96xf32, #tpu.memory_space<vmem>>, vector<8x96xf32>
    %99 = arith.subf %98, %17 : vector<8x96xf32>
    %100 = math.absf %99 : vector<8x96xf32>
    %101 = vector.shape_cast %100 : vector<8x96xf32> to vector<1x8x96xf32>
    %cst_44 = arith.constant dense<0.000000e+00> : vector<8x96xf32>
    %102 = vector.multi_reduction <add>, %101, %cst_44 [0] : vector<1x8x96xf32> to vector<8x96xf32>
    %103 = arith.addf %75, %102 : vector<8x96xf32>
    %c0_45 = arith.constant 0 : index
    %c0_46 = arith.constant 0 : index
    %104 = vector.load %arg11[%c0_45, %c0_46] : memref<8x128xf32, #tpu.memory_space<vmem>>, vector<8x128xf32>
    %105 = arith.addf %104, %97 : vector<8x128xf32>
    %c0_47 = arith.constant 0 : index
    %c0_48 = arith.constant 0 : index
    %106 = vector.load %arg11[%c0_47, %c0_48] : memref<8x128xf32, #tpu.memory_space<vmem>>, vector<8x128xf32>
    tpu.vector_store %arg11[%c0_47, %c0_48], %105 {strides = array<i32>} : memref<8x128xf32, #tpu.memory_space<vmem>>, vector<8x128xf32>,
    %c0_49 = arith.constant 0 : index
    %c0_50 = arith.constant 0 : index
    %107 = vector.load %arg12[%c0_49, %c0_50] : memref<8x96xf32, #tpu.memory_space<vmem>>, vector<8x96xf32>
    %108 = arith.addf %107, %103 : vector<8x96xf32>
    %c0_51 = arith.constant 0 : index
    %c0_52 = arith.constant 0 : index
    %109 = vector.load %arg12[%c0_51, %c0_52] : memref<8x96xf32, #tpu.memory_space<vmem>>, vector<8x96xf32>
    tpu.vector_store %arg12[%c0_51, %c0_52], %108 {strides = array<i32>} : memref<8x96xf32, #tpu.memory_space<vmem>>, vector<8x96xf32>,
    %c3_i32 = arith.constant 3 : i32
    %110 = arith.cmpi eq, %arg1, %c3_i32 : i32
    %111 = arith.extui %110 : i1 to i32
    %c0_i32_53 = arith.constant 0 : i32
    %112 = arith.cmpi ne, %111, %c0_i32_53 : i32
    scf.if %112 {
      %c0_54 = arith.constant 0 : index
      %c0_55 = arith.constant 0 : index
      %113 = vector.load %arg11[%c0_54, %c0_55] : memref<8x128xf32, #tpu.memory_space<vmem>>, vector<8x128xf32>
      %114 = vector.shape_cast %113 : vector<8x128xf32> to vector<1x8x128xf32>
      %cst_56 = arith.constant dense<0.000000e+00> : vector<1xf32>
      %115 = vector.multi_reduction <add>, %114, %cst_56 [1, 2] : vector<1x8x128xf32> to vector<1xf32>
      %116 = vector.shape_cast %115 : vector<1xf32> to vector<1x1x1xf32>
      %117 = vector.extract %116[0, 0, 0] : f32 from vector<1x1x1xf32>
      %cst_57 = arith.constant -2.8483073E-5 : f32
      %118 = arith.mulf %cst_57, %117 : f32
      %c0_58 = arith.constant 0 : index
      %c0_59 = arith.constant 0 : index
      %119 = vector.load %arg12[%c0_58, %c0_59] : memref<8x96xf32, #tpu.memory_space<vmem>>, vector<8x96xf32>
      %120 = vector.shape_cast %119 : vector<8x96xf32> to vector<1x8x96xf32>
      %cst_60 = arith.constant dense<0.000000e+00> : vector<1xf32>
      %121 = vector.multi_reduction <add>, %120, %cst_60 [1, 2] : vector<1x8x96xf32> to vector<1xf32>
      %122 = vector.shape_cast %121 : vector<1xf32> to vector<1x1x1xf32>
      %123 = vector.extract %122[0, 0, 0] : f32 from vector<1x1x1xf32>
      %cst_61 = arith.constant 7.05295169E-5 : f32
      %124 = arith.mulf %cst_61, %123 : f32
      %125 = arith.addf %118, %124 : f32
      %126 = vector.broadcast %125 : f32 to vector<1x1x1xf32>
      %c0_62 = arith.constant 0 : index
      %c0_63 = arith.constant 0 : index
      %c0_64 = arith.constant 0 : index
      %127 = vector.load %arg10[%c0_62, %c0_63, %c0_64] : memref<1x1x1xf32, #tpu.memory_space<vmem>>, vector<1x1x1xf32>
      tpu.vector_store %arg10[%c0_62, %c0_63, %c0_64], %126 {strides = array<i32>} : memref<1x1x1xf32, #tpu.memory_space<vmem>>, vector<1x1x1xf32>,
    } else {
    }
    return
  }
  func.func @transform_0(%arg0: i32, %arg1: i32) -> (i32, i32) {
    %c4_i32 = arith.constant 4 : i32
    %0 = arith.muli %arg0, %c4_i32 : i32
    %1 = arith.addi %0, %arg1 : i32
    %c0_i32 = arith.constant 0 : i32
    %c0_i32_0 = arith.constant 0 : i32
    return %1, %c0_i32 : i32, i32
  }
  func.func @transform_1(%arg0: i32, %arg1: i32) -> (i32, i32) {
    %c4_i32 = arith.constant 4 : i32
    %0 = arith.muli %arg0, %c4_i32 : i32
    %1 = arith.addi %0, %arg1 : i32
    %c0_i32 = arith.constant 0 : i32
    %c0_i32_0 = arith.constant 0 : i32
    return %1, %c0_i32 : i32, i32
  }
  func.func @transform_2(%arg0: i32, %arg1: i32) -> (i32, i32) {
    %c4_i32 = arith.constant 4 : i32
    %0 = arith.muli %arg0, %c4_i32 : i32
    %1 = arith.addi %0, %arg1 : i32
    %c0_i32 = arith.constant 0 : i32
    %c0_i32_0 = arith.constant 0 : i32
    return %1, %c0_i32 : i32, i32
  }
  func.func @transform_3(%arg0: i32, %arg1: i32) -> (i32, i32) {
    %c4_i32 = arith.constant 4 : i32
    %0 = arith.muli %arg0, %c4_i32 : i32
    %1 = arith.addi %0, %arg1 : i32
    %c0_i32 = arith.constant 0 : i32
    %c0_i32_0 = arith.constant 0 : i32
    return %1, %c0_i32 : i32, i32
  }
  func.func @transform_4(%arg0: i32, %arg1: i32) -> (i32, i32) {
    %c4_i32 = arith.constant 4 : i32
    %0 = arith.muli %arg0, %c4_i32 : i32
    %1 = arith.addi %0, %arg1 : i32
    %c0_i32 = arith.constant 0 : i32
    %c0_i32_0 = arith.constant 0 : i32
    return %1, %c0_i32 : i32, i32
  }
  func.func @transform_5(%arg0: i32, %arg1: i32) -> (i32, i32) {
    %c4_i32 = arith.constant 4 : i32
    %0 = arith.muli %arg0, %c4_i32 : i32
    %1 = arith.addi %0, %arg1 : i32
    %c0_i32 = arith.constant 0 : i32
    %c0_i32_0 = arith.constant 0 : i32
    return %1, %c0_i32 : i32, i32
  }
  func.func @transform_6(%arg0: i32, %arg1: i32) -> (i32, i32) {
    %c4_i32 = arith.constant 4 : i32
    %0 = arith.muli %arg0, %c4_i32 : i32
    %1 = arith.addi %0, %arg1 : i32
    %c0_i32 = arith.constant 0 : i32
    %c0_i32_0 = arith.constant 0 : i32
    return %1, %c0_i32 : i32, i32
  }
  func.func @transform_7(%arg0: i32, %arg1: i32) -> (i32, i32) {
    %c4_i32 = arith.constant 4 : i32
    %0 = arith.muli %arg0, %c4_i32 : i32
    %1 = arith.addi %0, %arg1 : i32
    %c0_i32 = arith.constant 0 : i32
    %c0_i32_0 = arith.constant 0 : i32
    return %1, %c0_i32 : i32, i32
  }
  func.func @transform_8(%arg0: i32, %arg1: i32) -> (i32, i32, i32) {
    %c0_i32 = arith.constant 0 : i32
    %c0_i32_0 = arith.constant 0 : i32
    %c0_i32_1 = arith.constant 0 : i32
    return %arg0, %c0_i32, %c0_i32_0 : i32, i32, i32
  }
}

</mosaic_0001>

<llo_original>
// kernel: tpu_custom_call.1
$region0: #{tpu_custom_call.1}
  #allocation0 [shape = 'u32[]', space=smem, size = 0x4, offset = 0x4, fixed_abs, tag = 'smem constant byte address 0x4 - core index']
  #allocation1 [shape = 'u32[144,128]{1,0:T(1,128)}', space=vmem, size = 0x12000, scoped, tag = 'internal scratch']
  #allocation2 [shape = 'f32[8,128]{1,0:T(8,128)}', space=vmem, size = 0x1000, scoped, tag = 'scratch operand']
  #allocation3 [shape = 'f32[8,96]{1,0:T(8,128)}', space=vmem, size = 0x1000, scoped, tag = 'scratch operand']
  %s0 = inlined_call_operand.hbm [shape: f32[64,128], index: 0, kind: input, shape index: {}]
  %s1 = inlined_call_operand.hbm [shape: f32[64,96], index: 1, kind: input, shape index: {}]
  %s2 = inlined_call_operand.hbm [shape: f32[64,128], index: 2, kind: input, shape index: {}]
  %s3 = inlined_call_operand.hbm [shape: f32[64,128], index: 3, kind: input, shape index: {}]
  %s4 = inlined_call_operand.hbm [shape: f32[64,128], index: 4, kind: input, shape index: {}]
  %s5 = inlined_call_operand.hbm [shape: f32[64,96], index: 5, kind: input, shape index: {}]
  %s6 = inlined_call_operand.hbm [shape: f32[64,96], index: 6, kind: input, shape index: {}]
  %s7 = inlined_call_operand.hbm [shape: f32[64,96], index: 7, kind: input, shape index: {}]
  %s8 = inlined_call_operand.vmem [shape: f32[2,1,1], index: 8, kind: output, shape index: {}]
  %s9 = sld [smem:[#allocation0]]
  $region105: #{tpu_custom_call.1} parent=0
    _
  %s11 = ssub.s32 1, %s9
  %s12 = scalar_select 0, %s11, %s9
  $region1: #{tpu_custom_call.1} parent=0
    #allocation4 [shape = 'u8[8192]{0}', space=vmem, size = 0x2000, scoped, tag = 'input window, operand 0']
    #allocation5 [shape = 's32[2]{0}', space=sflag, size = 0x8, scoped, tag = 'scoped memory for tpu_custom_call.1']
    #allocation6 [shape = 'u8[8192]{0}', space=vmem, size = 0x2000, scoped, tag = 'input window, operand 1']
    #allocation7 [shape = 's32[2]{0}', space=sflag, size = 0x8, scoped, tag = 'scoped memory for tpu_custom_call.1']
    #allocation8 [shape = 'u8[8192]{0}', space=vmem, size = 0x2000, scoped, tag = 'input window, operand 2']
    #allocation9 [shape = 'u8[8192]{0}', space=vmem, size = 0x2000, scoped, tag = 'input window, operand 3']
    #allocation10 [shape = 's32[2]{0}', space=sflag, size = 0x8, scoped, tag = 'scoped memory for tpu_custom_call.1']
    #allocation11 [shape = 'u8[8192]{0}', space=vmem, size = 0x2000, scoped, tag = 'input window, operand 4']
    #allocation12 [shape = 'u8[8192]{0}', space=vmem, size = 0x2000, scoped, tag = 'input window, operand 5']
    #allocation13 [shape = 's32[2]{0}', space=sflag, size = 0x8, scoped, tag = 'scoped memory for tpu_custom_call.1']
    #allocation14 [shape = 'u8[8192]{0}', space=vmem, size = 0x2000, scoped, tag = 'input window, operand 6']
    #allocation15 [shape = 'u8[8192]{0}', space=vmem, size = 0x2000, scoped, tag = 'input window, operand 7']
    #allocation16 [shape = 's32[2]{0}', space=sflag, size = 0x8, scoped, tag = 'scoped memory for tpu_custom_call.1']
    %13 = vsyncpa [#allocation5], 0
    %s14 = scalar_lea.sflag [#allocation5], 1
    %15 = vsyncpa %s14, 0
    %16 = vsyncpa [#allocation7], 0
    %s17 = scalar_lea.sflag [#allocation7], 1
    %18 = vsyncpa %s17, 0
    %19 = vsyncpa [#allocation10], 0
    %s20 = scalar_lea.sflag [#allocation10], 1
    %21 = vsyncpa %s20, 0
    %22 = vsyncpa [#allocation13], 0
    %s23 = scalar_lea.sflag [#allocation13], 1
    %24 = vsyncpa %s23, 0
    %25 = vsyncpa [#allocation16], 0
    %s26 = scalar_lea.sflag [#allocation16], 1
    %27 = vsyncpa %s26, 0
    loop: start=0, step=1, limit=10
    $region2: #{tpu_custom_call.1} parent=1 // loop_pre_header
      _
    $region3: #{tpu_custom_call.1} parent=1 // loop_header
      %s29 = sphi 0, %s33
      %p30 = scmp.ge.s32.totalorder %s29, 10
      %s36 = sphi 0, %s48
      %s37 = sphi 0, %s44
      %s38 = sphi 0, %s36
      %s39 = sphi 0, %s37
      %s40 = sphi 0, %s38
      %s41 = sphi 0, %s39
      %s55 = sphi 0, %s57
      %s58 = sphi 0, %s55
      %s59 = sphi 0, %s58
      %s75 = sphi 0, %s59
      %s85 = sphi 0, %s87
      %s88 = sphi 0, %s85
      %s89 = sphi 0, %s88
      %s105 = sphi 0, %s89
      %s115 = sphi 0, %s117
      %s118 = sphi 0, %s115
      %s119 = sphi 0, %s118
      %s135 = sphi 0, %s119
      %s145 = sphi 0, %s147
      %s148 = sphi 0, %s145
      %s149 = sphi 0, %s148
      %s165 = sphi 0, %s149
      %s175 = sphi 0, %s177
      %s178 = sphi 0, %s175
      %s179 = sphi 0, %s178
      %s195 = sphi 0, %s179
      %s205 = sphi 0, %s207
      %s208 = sphi 0, %s205
      %s209 = sphi 0, %s208
      %s225 = sphi 0, %s209
      %s235 = sphi 0, %s237
      %s238 = sphi 0, %s235
      %s239 = sphi 0, %s238
      %s255 = sphi 0, %s239
      %s265 = sphi 0, %s267
      %s268 = sphi 0, %s265
      %s269 = sphi 0, %s268
      %s285 = sphi 0, %s269
      %s291 = sphi 0, %s293
      %s294 = sphi 0, %s291
      %s295 = sphi 0, %s294
      %s311 = sphi 0, %s295
    $region4: #{tpu_custom_call.1} parent=1 // loop_header_branch
      %32 = sbr.rel (%p30) target = $region8
    $region5: #{tpu_custom_call.1} parent=1 // loop_body
      %s34 = ssub.s32 %s29, 1
      %s35 = ssub.s32 %s29, 2
      %s42 = sadd.s32 1, %s37
      %p43 = scmp.ge.s32.totalorder %s42, 4
      %s44 = scalar_select %p43, 0, %s42
      %s45 = sadd.s32 1, %s36
      %s46 = scalar_select %p43, %s45, %s36
      %p47 = scmp.ge.s32.totalorder %s46, 2
      %s48 = scalar_select %p47, 0, %s46
      %s49 = smul.u32 %s36, 4
      %s50 = sadd.s32 %s49, %s37
      %s51 = smul.u32 %s48, 4
      %s52 = sadd.s32 %s51, %s44
      %s53 = ssub.s32 %s50, %s52
      %p54 = scmp.eq.s32.totalorder %s53, 0
      %s56 = sadd.s32 %s55, 1
      %s57 = scalar_select %p54, %s55, %s56
      %p60 = pneg %p54
      %p61 = scmp.eq.s32.totalorder %s29, 7
      %p62 = por %p60, %p61
      %p63 = scmp.ne.s32.totalorder %s55, %s58
      %p64 = scmp.eq.s32.totalorder %s29, 0
      %p65 = por %p63, %p64
      %p66 = scmp.ne.s32.totalorder %s55, %s58
      %p67 = scmp.eq.s32.totalorder %s34, 7
      %p68 = por %p66, %p67
      %p69 = scmp.ne.s32.totalorder %s58, %s59
      %p70 = scmp.eq.s32.totalorder %s34, 0
      %p71 = por %p69, %p70
      %p72 = scmp.ne.s32.totalorder %s58, %s59
      %p73 = scmp.eq.s32.totalorder %s35, 7
      %p74 = por %p72, %p73
      %p76 = scmp.ne.s32.totalorder %s59, %s75
      %p77 = scmp.eq.s32.totalorder %s35, 0
      %p78 = por %p76, %p77
      %s79 = smul.u32 %s36, 4
      %s80 = sadd.s32 %s79, %s37
      %s81 = smul.u32 %s48, 4
      %s82 = sadd.s32 %s81, %s44
      %s83 = ssub.s32 %s80, %s82
      %p84 = scmp.eq.s32.totalorder %s83, 0
      %s86 = sadd.s32 %s85, 1
      %s87 = scalar_select %p84, %s85, %s86
      %p90 = pneg %p84
      %p91 = scmp.eq.s32.totalorder %s29, 7
      %p92 = por %p90, %p91
      %p93 = scmp.ne.s32.totalorder %s85, %s88
      %p94 = scmp.eq.s32.totalorder %s29, 0
      %p95 = por %p93, %p94
      %p96 = scmp.ne.s32.totalorder %s85, %s88
      %p97 = scmp.eq.s32.totalorder %s34, 7
      %p98 = por %p96, %p97
      %p99 = scmp.ne.s32.totalorder %s88, %s89
      %p100 = scmp.eq.s32.totalorder %s34, 0
      %p101 = por %p99, %p100
      %p102 = scmp.ne.s32.totalorder %s88, %s89
      %p103 = scmp.eq.s32.totalorder %s35, 7
      %p104 = por %p102, %p103
      %p106 = scmp.ne.s32.totalorder %s89, %s105
      %p107 = scmp.eq.s32.totalorder %s35, 0
      %p108 = por %p106, %p107
      %s109 = smul.u32 %s36, 4
      %s110 = sadd.s32 %s109, %s37
      %s111 = smul.u32 %s48, 4
      %s112 = sadd.s32 %s111, %s44
      %s113 = ssub.s32 %s110, %s112
      %p114 = scmp.eq.s32.totalorder %s113, 0
      %s116 = sadd.s32 %s115, 1
      %s117 = scalar_select %p114, %s115, %s116
      %p120 = pneg %p114
      %p121 = scmp.eq.s32.totalorder %s29, 7
      %p122 = por %p120, %p121
      %p123 = scmp.ne.s32.totalorder %s115, %s118
      %p124 = scmp.eq.s32.totalorder %s29, 0
      %p125 = por %p123, %p124
      %p126 = scmp.ne.s32.totalorder %s115, %s118
      %p127 = scmp.eq.s32.totalorder %s34, 7
      %p128 = por %p126, %p127
      %p129 = scmp.ne.s32.totalorder %s118, %s119
      %p130 = scmp.eq.s32.totalorder %s34, 0
      %p131 = por %p129, %p130
      %p132 = scmp.ne.s32.totalorder %s118, %s119
      %p133 = scmp.eq.s32.totalorder %s35, 7
      %p134 = por %p132, %p133
      %p136 = scmp.ne.s32.totalorder %s119, %s135
      %p137 = scmp.eq.s32.totalorder %s35, 0
      %p138 = por %p136, %p137
      %s139 = smul.u32 %s36, 4
      %s140 = sadd.s32 %s139, %s37
      %s141 = smul.u32 %s48, 4
      %s142 = sadd.s32 %s141, %s44
      %s143 = ssub.s32 %s140, %s142
      %p144 = scmp.eq.s32.totalorder %s143, 0
      %s146 = sadd.s32 %s145, 1
      %s147 = scalar_select %p144, %s145, %s146
      %p150 = pneg %p144
      %p151 = scmp.eq.s32.totalorder %s29, 7
      %p152 = por %p150, %p151
      %p153 = scmp.ne.s32.totalorder %s145, %s148
      %p154 = scmp.eq.s32.totalorder %s29, 0
      %p155 = por %p153, %p154
      %p156 = scmp.ne.s32.totalorder %s145, %s148
      %p157 = scmp.eq.s32.totalorder %s34, 7
      %p158 = por %p156, %p157
      %p159 = scmp.ne.s32.totalorder %s148, %s149
      %p160 = scmp.eq.s32.totalorder %s34, 0
      %p161 = por %p159, %p160
      %p162 = scmp.ne.s32.totalorder %s148, %s149
      %p163 = scmp.eq.s32.totalorder %s35, 7
      %p164 = por %p162, %p163
      %p166 = scmp.ne.s32.totalorder %s149, %s165
      %p167 = scmp.eq.s32.totalorder %s35, 0
      %p168 = por %p166, %p167
      %s169 = smul.u32 %s36, 4
      %s170 = sadd.s32 %s169, %s37
      %s171 = smul.u32 %s48, 4
      %s172 = sadd.s32 %s171, %s44
      %s173 = ssub.s32 %s170, %s172
      %p174 = scmp.eq.s32.totalorder %s173, 0
      %s176 = sadd.s32 %s175, 1
      %s177 = scalar_select %p174, %s175, %s176
      %p180 = pneg %p174
      %p181 = scmp.eq.s32.totalorder %s29, 7
      %p182 = por %p180, %p181
      %p183 = scmp.ne.s32.totalorder %s175, %s178
      %p184 = scmp.eq.s32.totalorder %s29, 0
      %p185 = por %p183, %p184
      %p186 = scmp.ne.s32.totalorder %s175, %s178
      %p187 = scmp.eq.s32.totalorder %s34, 7
      %p188 = por %p186, %p187
      %p189 = scmp.ne.s32.totalorder %s178, %s179
      %p190 = scmp.eq.s32.totalorder %s34, 0
      %p191 = por %p189, %p190
      %p192 = scmp.ne.s32.totalorder %s178, %s179
      %p193 = scmp.eq.s32.totalorder %s35, 7
      %p194 = por %p192, %p193
      %p196 = scmp.ne.s32.totalorder %s179, %s195
      %p197 = scmp.eq.s32.totalorder %s35, 0
      %p198 = por %p196, %p197
      %s199 = smul.u32 %s36, 4
      %s200 = sadd.s32 %s199, %s37
      %s201 = smul.u32 %s48, 4
      %s202 = sadd.s32 %s201, %s44
      %s203 = ssub.s32 %s200, %s202
      %p204 = scmp.eq.s32.totalorder %s203, 0
      %s206 = sadd.s32 %s205, 1
      %s207 = scalar_select %p204, %s205, %s206
      %p210 = pneg %p204
      %p211 = scmp.eq.s32.totalorder %s29, 7
      %p212 = por %p210, %p211
      %p213 = scmp.ne.s32.totalorder %s205, %s208
      %p214 = scmp.eq.s32.totalorder %s29, 0
      %p215 = por %p213, %p214
      %p216 = scmp.ne.s32.totalorder %s205, %s208
      %p217 = scmp.eq.s32.totalorder %s34, 7
      %p218 = por %p216, %p217
      %p219 = scmp.ne.s32.totalorder %s208, %s209
      %p220 = scmp.eq.s32.totalorder %s34, 0
      %p221 = por %p219, %p220
      %p222 = scmp.ne.s32.totalorder %s208, %s209
      %p223 = scmp.eq.s32.totalorder %s35, 7
      %p224 = por %p222, %p223
      %p226 = scmp.ne.s32.totalorder %s209, %s225
      %p227 = scmp.eq.s32.totalorder %s35, 0
      %p228 = por %p226, %p227
      %s229 = smul.u32 %s36, 4
      %s230 = sadd.s32 %s229, %s37
      %s231 = smul.u32 %s48, 4
      %s232 = sadd.s32 %s231, %s44
      %s233 = ssub.s32 %s230, %s232
      %p234 = scmp.eq.s32.totalorder %s233, 0
      %s236 = sadd.s32 %s235, 1
      %s237 = scalar_select %p234, %s235, %s236
      %p240 = pneg %p234
      %p241 = scmp.eq.s32.totalorder %s29, 7
      %p242 = por %p240, %p241
      %p243 = scmp.ne.s32.totalorder %s235, %s238
      %p244 = scmp.eq.s32.totalorder %s29, 0
      %p245 = por %p243, %p244
      %p246 = scmp.ne.s32.totalorder %s235, %s238
      %p247 = scmp.eq.s32.totalorder %s34, 7
      %p248 = por %p246, %p247
      %p249 = scmp.ne.s32.totalorder %s238, %s239
      %p250 = scmp.eq.s32.totalorder %s34, 0
      %p251 = por %p249, %p250
      %p252 = scmp.ne.s32.totalorder %s238, %s239
      %p253 = scmp.eq.s32.totalorder %s35, 7
      %p254 = por %p252, %p253
      %p256 = scmp.ne.s32.totalorder %s239, %s255
      %p257 = scmp.eq.s32.totalorder %s35, 0
      %p258 = por %p256, %p257
      %s259 = smul.u32 %s36, 4
      %s260 = sadd.s32 %s259, %s37
      %s261 = smul.u32 %s48, 4
      %s262 = sadd.s32 %s261, %s44
      %s263 = ssub.s32 %s260, %s262
      %p264 = scmp.eq.s32.totalorder %s263, 0
      %s266 = sadd.s32 %s265, 1
      %s267 = scalar_select %p264, %s265, %s266
      %p270 = pneg %p264
      %p271 = scmp.eq.s32.totalorder %s29, 7
      %p272 = por %p270, %p271
      %p273 = scmp.ne.s32.totalorder %s265, %s268
      %p274 = scmp.eq.s32.totalorder %s29, 0
      %p275 = por %p273, %p274
      %p276 = scmp.ne.s32.totalorder %s265, %s268
      %p277 = scmp.eq.s32.totalorder %s34, 7
      %p278 = por %p276, %p277
      %p279 = scmp.ne.s32.totalorder %s268, %s269
      %p280 = scmp.eq.s32.totalorder %s34, 0
      %p281 = por %p279, %p280
      %p282 = scmp.ne.s32.totalorder %s268, %s269
      %p283 = scmp.eq.s32.totalorder %s35, 7
      %p284 = por %p282, %p283
      %p286 = scmp.ne.s32.totalorder %s269, %s285
      %p287 = scmp.eq.s32.totalorder %s35, 0
      %p288 = por %p286, %p287
      %s289 = ssub.s32 %s36, %s48
      %p290 = scmp.eq.s32.totalorder %s289, 0
      %s292 = sadd.s32 %s291, 1
      %s293 = scalar_select %p290, %s291, %s292
      %p296 = pneg %p290
      %p297 = scmp.eq.s32.totalorder %s29, 7
      %p298 = por %p296, %p297
      %p299 = scmp.ne.s32.totalorder %s291, %s294
      %p300 = scmp.eq.s32.totalorder %s29, 0
      %p301 = por %p299, %p300
      %p302 = scmp.ne.s32.totalorder %s291, %s294
      %p303 = scmp.eq.s32.totalorder %s34, 7
      %p304 = por %p302, %p303
      %p305 = scmp.ne.s32.totalorder %s294, %s295
      %p306 = scmp.eq.s32.totalorder %s34, 0
      %p307 = por %p305, %p306
      %p308 = scmp.ne.s32.totalorder %s294, %s295
      %p309 = scmp.eq.s32.totalorder %s35, 7
      %p310 = por %p308, %p309
      %p312 = scmp.ne.s32.totalorder %s295, %s311
      %p313 = scmp.eq.s32.totalorder %s35, 0
      %p314 = por %p312, %p313
      %p315 = scmp.le.s32.totalorder 1, %s29
      %p316 = scmp.lt.s32.totalorder %s29, 9
      %p317 = pnand %p315, %p316
      %p318 = pneg %p317
      // Predicated region
      $region9: #{tpu_custom_call.1} parent=5 // pred_check
        _
      $region10: #{tpu_custom_call.1} parent=5 // pred_check_branch
        %320 = sbr.rel (%p317) target = $region12
      $region11: #{tpu_custom_call.1} parent=5 // pred_region
        %s321 = ssub.s32 %s29, 1
      $region12: #{tpu_custom_call.1} parent=5 // pred_fallthru
        _
      %p322 = scmp.lt.s32.totalorder %s29, 8
      // Predicated region
      $region13: #{tpu_custom_call.1} parent=5 // pred_check
        %p323 = pneg %p322
      $region14: #{tpu_custom_call.1} parent=5 // pred_check_branch
        %325 = sbr.rel (%p323) target = $region16
      $region15: #{tpu_custom_call.1} parent=5 // pred_region
        // Predicated region
        $region17: #{tpu_custom_call.1} parent=15 // pred_check
          %p326 = pneg %p65
        $region18: #{tpu_custom_call.1} parent=15 // pred_check_branch
          %328 = sbr.rel (%p326) target = $region20
        $region19: #{tpu_custom_call.1} parent=15 // pred_region
          %s329 = sand.u32 %s55, 1
          %s330 = scalar_lea.sflag [#allocation5], %s329
          %s331 = sand.u32 %s55, 1
          %s332 = smul.addr %s331, 8
          %s333 = scalar_lea.vmem [#allocation4], %s332
          %s334 = smul.u32 %s36, 4
          %s335 = sadd.s32 %s334, %s37
          %s337 = ssub.s32 128, 128
          %338 = vsyncadd %s330, %s337
          %s339 = smul.addr %s335, 128
          %s340 = scalar_lea.hbm %s0, %s339
          %s342 = sshll.u32 %s333, 4
          %s343 = int_to_ptr.vmem [resolvable:$true] %s342
          %345 = dma.hbm_to_vmem [thread:$0]  %s340, 128, %s343, %s330
        $region20: #{tpu_custom_call.1} parent=15 // pred_fallthru
          _
        // Predicated region
        $region21: #{tpu_custom_call.1} parent=15 // pred_check
          %p346 = pneg %p95
        $region22: #{tpu_custom_call.1} parent=15 // pred_check_branch
          %348 = sbr.rel (%p346) target = $region24
        $region23: #{tpu_custom_call.1} parent=15 // pred_region
          %s349 = sand.u32 %s29, 1
          %s350 = scalar_lea.sflag [#allocation7], %s349
          %s351 = sand.u32 %s85, 1
          %s352 = smul.addr %s351, 8
          %s353 = scalar_lea.vmem [#allocation6], %s352
          %s354 = smul.u32 %s36, 4
          %s355 = sadd.s32 %s354, %s37
          %s357 = ssub.s32 128, 128
          %358 = vsyncadd %s350, %s357
          %s359 = smul.addr %s355, 128
          %s360 = scalar_lea.hbm %s1, %s359
          %s362 = sshll.u32 %s353, 4
          %s363 = int_to_ptr.vmem [resolvable:$true] %s362
          %365 = dma.hbm_to_vmem [thread:$0]  %s360, 128, %s363, %s350
        $region24: #{tpu_custom_call.1} parent=15 // pred_fallthru
          _
        // Predicated region
        $region25: #{tpu_custom_call.1} parent=15 // pred_check
          %p366 = pneg %p125
        $region26: #{tpu_custom_call.1} parent=15 // pred_check_branch
          %368 = sbr.rel (%p366) target = $region28
        $region27: #{tpu_custom_call.1} parent=15 // pred_region
          %s369 = sand.u32 %s29, 1
          %s370 = scalar_lea.sflag [#allocation7], %s369
          %s371 = sand.u32 %s115, 1
          %s372 = smul.addr %s371, 8
          %s373 = scalar_lea.vmem [#allocation8], %s372
          %s374 = smul.u32 %s36, 4
          %s375 = sadd.s32 %s374, %s37
          %s377 = ssub.s32 128, 128
          %378 = vsyncadd %s370, %s377
          %s379 = smul.addr %s375, 128
          %s380 = scalar_lea.hbm %s2, %s379
          %s382 = sshll.u32 %s373, 4
          %s383 = int_to_ptr.vmem [resolvable:$true] %s382
          %385 = dma.hbm_to_vmem [thread:$0]  %s380, 128, %s383, %s370
        $region28: #{tpu_custom_call.1} parent=15 // pred_fallthru
          _
        // Predicated region
        $region29: #{tpu_custom_call.1} parent=15 // pred_check
          %p386 = pneg %p155
        $region30: #{tpu_custom_call.1} parent=15 // pred_check_branch
          %388 = sbr.rel (%p386) target = $region32
        $region31: #{tpu_custom_call.1} parent=15 // pred_region
          %s389 = sand.u32 %s29, 1
          %s390 = scalar_lea.sflag [#allocation10], %s389
          %s391 = sand.u32 %s145, 1
          %s392 = smul.addr %s391, 8
          %s393 = scalar_lea.vmem [#allocation9], %s392
          %s394 = smul.u32 %s36, 4
          %s395 = sadd.s32 %s394, %s37
          %s397 = ssub.s32 128, 128
          %398 = vsyncadd %s390, %s397
          %s399 = smul.addr %s395, 128
          %s400 = scalar_lea.hbm %s3, %s399
          %s402 = sshll.u32 %s393, 4
          %s403 = int_to_ptr.vmem [resolvable:$true] %s402
          %405 = dma.hbm_to_vmem [thread:$0]  %s400, 128, %s403, %s390
        $region32: #{tpu_custom_call.1} parent=15 // pred_fallthru
          _
        // Predicated region
        $region33: #{tpu_custom_call.1} parent=15 // pred_check
          %p406 = pneg %p185
        $region34: #{tpu_custom_call.1} parent=15 // pred_check_branch
          %408 = sbr.rel (%p406) target = $region36
        $region35: #{tpu_custom_call.1} parent=15 // pred_region
          %s409 = sand.u32 %s29, 1
          %s410 = scalar_lea.sflag [#allocation10], %s409
          %s411 = sand.u32 %s175, 1
          %s412 = smul.addr %s411, 8
          %s413 = scalar_lea.vmem [#allocation11], %s412
          %s414 = smul.u32 %s36, 4
          %s415 = sadd.s32 %s414, %s37
          %s417 = ssub.s32 128, 128
          %418 = vsyncadd %s410, %s417
          %s419 = smul.addr %s415, 128
          %s420 = scalar_lea.hbm %s4, %s419
          %s422 = sshll.u32 %s413, 4
          %s423 = int_to_ptr.vmem [resolvable:$true] %s422
          %425 = dma.hbm_to_vmem [thread:$0]  %s420, 128, %s423, %s410
        $region36: #{tpu_custom_call.1} parent=15 // pred_fallthru
          _
        // Predicated region
        $region37: #{tpu_custom_call.1} parent=15 // pred_check
          %p426 = pneg %p215
        $region38: #{tpu_custom_call.1} parent=15 // pred_check_branch
          %428 = sbr.rel (%p426) target = $region40
        $region39: #{tpu_custom_call.1} parent=15 // pred_region
          %s429 = sand.u32 %s29, 1
          %s430 = scalar_lea.sflag [#allocation13], %s429
          %s431 = sand.u32 %s205, 1
          %s432 = smul.addr %s431, 8
          %s433 = scalar_lea.vmem [#allocation12], %s432
          %s434 = smul.u32 %s36, 4
          %s435 = sadd.s32 %s434, %s37
          %s437 = ssub.s32 128, 128
          %438 = vsyncadd %s430, %s437
          %s439 = smul.addr %s435, 128
          %s440 = scalar_lea.hbm %s5, %s439
          %s442 = sshll.u32 %s433, 4
          %s443 = int_to_ptr.vmem [resolvable:$true] %s442
          %445 = dma.hbm_to_vmem [thread:$0]  %s440, 128, %s443, %s430
        $region40: #{tpu_custom_call.1} parent=15 // pred_fallthru
          _
        // Predicated region
        $region41: #{tpu_custom_call.1} parent=15 // pred_check
          %p446 = pneg %p245
        $region42: #{tpu_custom_call.1} parent=15 // pred_check_branch
          %448 = sbr.rel (%p446) target = $region44
        $region43: #{tpu_custom_call.1} parent=15 // pred_region
          %s449 = sand.u32 %s29, 1
          %s450 = scalar_lea.sflag [#allocation13], %s449
          %s451 = sand.u32 %s235, 1
          %s452 = smul.addr %s451, 8
          %s453 = scalar_lea.vmem [#allocation14], %s452
          %s454 = smul.u32 %s36, 4
          %s455 = sadd.s32 %s454, %s37
          %s457 = ssub.s32 128, 128
          %458 = vsyncadd %s450, %s457
          %s459 = smul.addr %s455, 128
          %s460 = scalar_lea.hbm %s6, %s459
          %s462 = sshll.u32 %s453, 4
          %s463 = int_to_ptr.vmem [resolvable:$true] %s462
          %465 = dma.hbm_to_vmem [thread:$0]  %s460, 128, %s463, %s450
        $region44: #{tpu_custom_call.1} parent=15 // pred_fallthru
          _
        // Predicated region
        $region45: #{tpu_custom_call.1} parent=15 // pred_check
          %p466 = pneg %p275
        $region46: #{tpu_custom_call.1} parent=15 // pred_check_branch
          %468 = sbr.rel (%p466) target = $region48
        $region47: #{tpu_custom_call.1} parent=15 // pred_region
          %s469 = sand.u32 %s265, 1
          %s470 = scalar_lea.sflag [#allocation16], %s469
          %s471 = sand.u32 %s265, 1
          %s472 = smul.addr %s471, 8
          %s473 = scalar_lea.vmem [#allocation15], %s472
          %s474 = smul.u32 %s36, 4
          %s475 = sadd.s32 %s474, %s37
          %s477 = ssub.s32 128, 128
          %478 = vsyncadd %s470, %s477
          %s479 = smul.addr %s475, 128
          %s480 = scalar_lea.hbm %s7, %s479
          %s482 = sshll.u32 %s473, 4
          %s483 = int_to_ptr.vmem [resolvable:$true] %s482
          %485 = dma.hbm_to_vmem [thread:$0]  %s480, 128, %s483, %s470
        $region48: #{tpu_custom_call.1} parent=15 // pred_fallthru
          _
      $region16: #{tpu_custom_call.1} parent=5 // pred_fallthru
        _
      %p486 = scmp.le.s32.totalorder 1, %s29
      %p487 = scmp.lt.s32.totalorder %s29, 9
      %p488 = pnand %p486, %p487
      %p489 = pneg %p488
      // Predicated region
      $region49: #{tpu_custom_call.1} parent=5 // pred_check
        _
      $region50: #{tpu_custom_call.1} parent=5 // pred_check_branch
        %491 = sbr.rel (%p488) target = $region52
      $region51: #{tpu_custom_call.1} parent=5 // pred_region
        %s492 = ssub.s32 %s29, 1
        %s493 = sand.u32 %s58, 1
        %s494 = scalar_lea.sflag [#allocation5], %s493
        %s495 = sand.u32 %s58, 1
        %s496 = smul.addr %s495, 8
        %s497 = scalar_lea.vmem [#allocation4], %s496
        // Predicated region
        $region53: #{tpu_custom_call.1} parent=51 // pred_check
          %p498 = pneg %p71
        $region54: #{tpu_custom_call.1} parent=51 // pred_check_branch
          %500 = sbr.rel (%p498) target = $region56
        $region55: #{tpu_custom_call.1} parent=51 // pred_region
          %501 = dma.done %s494, 128
        $region56: #{tpu_custom_call.1} parent=51 // pred_fallthru
          _
        %s502 = sand.u32 %s34, 1
        %s503 = scalar_lea.sflag [#allocation7], %s502
        %s504 = sand.u32 %s88, 1
        %s505 = smul.addr %s504, 8
        %s506 = scalar_lea.vmem [#allocation6], %s505
        // Predicated region
        $region57: #{tpu_custom_call.1} parent=51 // pred_check
          %p507 = pneg %p101
        $region58: #{tpu_custom_call.1} parent=51 // pred_check_branch
          %509 = sbr.rel (%p507) target = $region60
        $region59: #{tpu_custom_call.1} parent=51 // pred_region
          %510 = dma.done %s503, 128
        $region60: #{tpu_custom_call.1} parent=51 // pred_fallthru
          _
        %s511 = sand.u32 %s34, 1
        %s512 = scalar_lea.sflag [#allocation7], %s511
        %s513 = sand.u32 %s118, 1
        %s514 = smul.addr %s513, 8
        %s515 = scalar_lea.vmem [#allocation8], %s514
        // Predicated region
        $region61: #{tpu_custom_call.1} parent=51 // pred_check
          %p516 = pneg %p131
        $region62: #{tpu_custom_call.1} parent=51 // pred_check_branch
          %518 = sbr.rel (%p516) target = $region64
        $region63: #{tpu_custom_call.1} parent=51 // pred_region
          %519 = dma.done %s512, 128
        $region64: #{tpu_custom_call.1} parent=51 // pred_fallthru
          _
        %s520 = sand.u32 %s34, 1
        %s521 = scalar_lea.sflag [#allocation10], %s520
        %s522 = sand.u32 %s148, 1
        %s523 = smul.addr %s522, 8
        %s524 = scalar_lea.vmem [#allocation9], %s523
        // Predicated region
        $region65: #{tpu_custom_call.1} parent=51 // pred_check
          %p525 = pneg %p161
        $region66: #{tpu_custom_call.1} parent=51 // pred_check_branch
          %527 = sbr.rel (%p525) target = $region68
        $region67: #{tpu_custom_call.1} parent=51 // pred_region
          %528 = dma.done %s521, 128
        $region68: #{tpu_custom_call.1} parent=51 // pred_fallthru
          _
        %s529 = sand.u32 %s34, 1
        %s530 = scalar_lea.sflag [#allocation10], %s529
        %s531 = sand.u32 %s178, 1
        %s532 = smul.addr %s531, 8
        %s533 = scalar_lea.vmem [#allocation11], %s532
        // Predicated region
        $region69: #{tpu_custom_call.1} parent=51 // pred_check
          %p534 = pneg %p191
        $region70: #{tpu_custom_call.1} parent=51 // pred_check_branch
          %536 = sbr.rel (%p534) target = $region72
        $region71: #{tpu_custom_call.1} parent=51 // pred_region
          %537 = dma.done %s530, 128
        $region72: #{tpu_custom_call.1} parent=51 // pred_fallthru
          _
        %s538 = sand.u32 %s34, 1
        %s539 = scalar_lea.sflag [#allocation13], %s538
        %s540 = sand.u32 %s208, 1
        %s541 = smul.addr %s540, 8
        %s542 = scalar_lea.vmem [#allocation12], %s541
        // Predicated region
        $region73: #{tpu_custom_call.1} parent=51 // pred_check
          %p543 = pneg %p221
        $region74: #{tpu_custom_call.1} parent=51 // pred_check_branch
          %545 = sbr.rel (%p543) target = $region76
        $region75: #{tpu_custom_call.1} parent=51 // pred_region
          %546 = dma.done %s539, 128
        $region76: #{tpu_custom_call.1} parent=51 // pred_fallthru
          _
        %s547 = sand.u32 %s34, 1
        %s548 = scalar_lea.sflag [#allocation13], %s547
        %s549 = sand.u32 %s238, 1
        %s550 = smul.addr %s549, 8
        %s551 = scalar_lea.vmem [#allocation14], %s550
        // Predicated region
        $region77: #{tpu_custom_call.1} parent=51 // pred_check
          %p552 = pneg %p251
        $region78: #{tpu_custom_call.1} parent=51 // pred_check_branch
          %554 = sbr.rel (%p552) target = $region80
        $region79: #{tpu_custom_call.1} parent=51 // pred_region
          %555 = dma.done %s548, 128
        $region80: #{tpu_custom_call.1} parent=51 // pred_fallthru
          _
        %s556 = sand.u32 %s268, 1
        %s557 = scalar_lea.sflag [#allocation16], %s556
        %s558 = sand.u32 %s268, 1
        %s559 = smul.addr %s558, 8
        %s560 = scalar_lea.vmem [#allocation15], %s559
        // Predicated region
        $region81: #{tpu_custom_call.1} parent=51 // pred_check
          %p561 = pneg %p281
        $region82: #{tpu_custom_call.1} parent=51 // pred_check_branch
          %563 = sbr.rel (%p561) target = $region84
        $region83: #{tpu_custom_call.1} parent=51 // pred_region
          %564 = dma.done %s557, 128
        $region84: #{tpu_custom_call.1} parent=51 // pred_fallthru
          _
        %s565 = sand.u32 %s58, 1
        %s566 = scalar_lea.sflag [#allocation5], %s565
        %s567 = sand.u32 %s58, 1
        %s568 = smul.addr %s567, 8
        %s569 = scalar_lea.vmem [#allocation4], %s568
        %p570 = pneg %p71
        %p571 = pneg %p68
        %s572 = sand.u32 %s34, 1
        %s573 = scalar_lea.sflag [#allocation7], %s572
        %s574 = sand.u32 %s88, 1
        %s575 = smul.addr %s574, 8
        %s576 = scalar_lea.vmem [#allocation6], %s575
        %p577 = pneg %p101
        %p578 = pneg %p98
        %s579 = sand.u32 %s34, 1
        %s580 = scalar_lea.sflag [#allocation7], %s579
        %s581 = sand.u32 %s118, 1
        %s582 = smul.addr %s581, 8
        %s583 = scalar_lea.vmem [#allocation8], %s582
        %p584 = pneg %p131
        %p585 = pneg %p128
        %s586 = sand.u32 %s34, 1
        %s587 = scalar_lea.sflag [#allocation10], %s586
        %s588 = sand.u32 %s148, 1
        %s589 = smul.addr %s588, 8
        %s590 = scalar_lea.vmem [#allocation9], %s589
        %p591 = pneg %p161
        %p592 = pneg %p158
        %s593 = sand.u32 %s34, 1
        %s594 = scalar_lea.sflag [#allocation10], %s593
        %s595 = sand.u32 %s178, 1
        %s596 = smul.addr %s595, 8
        %s597 = scalar_lea.vmem [#allocation11], %s596
        %p598 = pneg %p191
        %p599 = pneg %p188
        %s600 = sand.u32 %s34, 1
        %s601 = scalar_lea.sflag [#allocation13], %s600
        %s602 = sand.u32 %s208, 1
        %s603 = smul.addr %s602, 8
        %s604 = scalar_lea.vmem [#allocation12], %s603
        %p605 = pneg %p221
        %p606 = pneg %p218
        %s607 = sand.u32 %s34, 1
        %s608 = scalar_lea.sflag [#allocation13], %s607
        %s609 = sand.u32 %s238, 1
        %s610 = smul.addr %s609, 8
        %s611 = scalar_lea.vmem [#allocation14], %s610
        %p612 = pneg %p251
        %p613 = pneg %p248
        %s614 = sand.u32 %s268, 1
        %s615 = scalar_lea.sflag [#allocation16], %s614
        %s616 = sand.u32 %s268, 1
        %s617 = smul.addr %s616, 8
        %s618 = scalar_lea.vmem [#allocation15], %s617
        %p619 = pneg %p281
        %p620 = pneg %p278
        %p621 = pneg %p307
        %p622 = pneg %p304
        %p623 = scmp.lt.s32.totalorder %s38, 1
        %s624 = scalar_select %p623, %s38, 1
        %s625 = scalar_lea.vmem %s8, %s624
        %s626 = smul.u32 %s38, 4
        %s627 = sadd.s32 %s626, %s39
        %s628 = smul.u32 %s38, 4
        %s629 = sadd.s32 %s628, %s39
        %s630 = smul.u32 %s38, 4
        %s631 = sadd.s32 %s630, %s39
        %s632 = smul.u32 %s38, 4
        %s633 = sadd.s32 %s632, %s39
        %s634 = smul.u32 %s38, 4
        %s635 = sadd.s32 %s634, %s39
        %s636 = smul.u32 %s38, 4
        %s637 = sadd.s32 %s636, %s39
        %s638 = smul.u32 %s38, 4
        %s639 = sadd.s32 %s638, %s39
        %s640 = smul.u32 %s38, 4
        %s641 = sadd.s32 %s640, %s39
        %p642 = scmp.lt.s32.totalorder %s38, 1
        %s643 = scalar_select %p642, %s38, 1
        %s644 = scalar_lea.vmem %s8, %s643
        %p645 = scmp.eq.s32.totalorder %s39, 0
        // Predicated region
        $region85: #{tpu_custom_call.1} parent=51 // pred_check
          %p646 = pneg %p645
        $region86: #{tpu_custom_call.1} parent=51 // pred_check_branch
          %648 = sbr.rel (%p646) target = $region88
        $region87: #{tpu_custom_call.1} parent=51 // pred_region
          %649 = vst [vmem:[#allocation2] sm:$0xff] 0.0
          %vm650 = vcmask 785408
          %651 = vst.msk [vmem:[#allocation3] sm:$0xff] %vm650, 0.0
        $region88: #{tpu_custom_call.1} parent=51 // pred_fallthru
          _
        %v652 = vld [vmem:[%s497] sm:$0xff]
        %653 = vadd.xlane.f32.xlu0 %v652
        %v654 = vpop.xlane.xlu0 %653
        %v655 = vmul.f32 %v654, 0.0078125
        %vm656 = vcmp.eq.f32.partialorder %v652, 1.0
        %v657 = vsub.f32 1.0, %v655
        %v658 = vsel %vm656, %v657, %v655
        %v659 = vld [vmem:[%s506] sm:$0xff]
        %v660 = vld [vmem:[%s515] sm:$0xff]
        %v661 = vsub.f32 0.0, %v660
        %v662 = vsel %vm656, %v660, %v661
        %v663 = vsub.f32 0.0, %v662
        %v664 = vmax.f32 %v663, 0.0
        %v665 = vand.u32 2147483647, %v662
        %v666 = vsub.f32 0.0, %v665
        %v667 = vmul.f32 %v666, 1.442695
        %v668 = vpow.pop %v667
        %v669 = vadd.f32 %v668, 1.0
        %v670 = vlog2.pop %v669
        %v671 = vmul.f32 %v670, 0.6931472
        %v672 = vmul.f32 -0.5, %v668
        %v673 = vadd.f32 %v672, 1.0
        %v674 = vmul.f32 %v673, %v668
        %v675 = vand.u32 2147483647, %v668
        %vm676 = vcmp.lt.f32.partialorder %v675, 0.0004427343
        %v677 = vsel %vm676, %v674, %v671
        %v678 = vadd.f32 %v664, %v677
        %v679 = vsub.f32 0.0, %v678
        %v680 = vmax.f32 %v679, -100.0
        %v681 = vmul.f32 %v658, %v680
        %v682 = vadd.f32 %v681, 0.0
        %v683 = vadd.f32 %v682, 0.0
        %v684 = vld [vmem:[%s542] sm:$0xff]
        %v685 = vsub.f32 %v684, %v659
        %v686 = vand.u32 2147483647, %v685
        %v687 = vadd.f32 %v686, 0.0
        %v688 = vadd.f32 %v687, 0.0
        %v689 = vld [vmem:[%s524] sm:$0xff]
        %v690 = vsub.f32 0.0, %v689
        %v691 = vsel %vm656, %v689, %v690
        %v692 = vsub.f32 0.0, %v691
        %v693 = vmax.f32 %v692, 0.0
        %v694 = vand.u32 2147483647, %v691
        %v695 = vsub.f32 0.0, %v694
        %v696 = vmul.f32 %v695, 1.442695
        %v697 = vpow.pop %v696
        %v698 = vadd.f32 %v697, 1.0
        %v699 = vlog2.pop %v698
        %v700 = vmul.f32 %v699, 0.6931472
        %v701 = vmul.f32 -0.5, %v697
        %v702 = vadd.f32 %v701, 1.0
        %v703 = vmul.f32 %v702, %v697
        %v704 = vand.u32 2147483647, %v697
        %vm705 = vcmp.lt.f32.partialorder %v704, 0.0004427343
        %v706 = vsel %vm705, %v703, %v700
        %v707 = vadd.f32 %v693, %v706
        %v708 = vsub.f32 0.0, %v707
        %v709 = vmax.f32 %v708, -100.0
        %v710 = vmul.f32 %v658, %v709
        %v711 = vadd.f32 %v710, 0.0
        %v712 = vadd.f32 %v683, %v711
        %v713 = vld [vmem:[%s551] sm:$0xff]
        %v714 = vsub.f32 %v713, %v659
        %v715 = vand.u32 2147483647, %v714
        %v716 = vadd.f32 %v715, 0.0
        %v717 = vadd.f32 %v688, %v716
        %v718 = vld [vmem:[%s533] sm:$0xff]
        %v719 = vsub.f32 0.0, %v718
        %v720 = vsel %vm656, %v718, %v719
        %v721 = vsub.f32 0.0, %v720
        %v722 = vmax.f32 %v721, 0.0
        %v723 = vand.u32 2147483647, %v720
        %v724 = vsub.f32 0.0, %v723
        %v725 = vmul.f32 %v724, 1.442695
        %v726 = vpow.pop %v725
        %v727 = vadd.f32 %v726, 1.0
        %v728 = vlog2.pop %v727
        %v729 = vmul.f32 %v728, 0.6931472
        %v730 = vmul.f32 -0.5, %v726
        %v731 = vadd.f32 %v730, 1.0
        %v732 = vmul.f32 %v731, %v726
        %v733 = vand.u32 2147483647, %v726
        %vm734 = vcmp.lt.f32.partialorder %v733, 0.0004427343
        %v735 = vsel %vm734, %v732, %v729
        %v736 = vadd.f32 %v722, %v735
        %v737 = vsub.f32 0.0, %v736
        %v738 = vmax.f32 %v737, -100.0
        %v739 = vmul.f32 %v658, %v738
        %v740 = vadd.f32 %v739, 0.0
        %v741 = vadd.f32 %v712, %v740
        %v742 = vld [vmem:[%s560] sm:$0xff]
        %v743 = vsub.f32 %v742, %v659
        %v744 = vand.u32 2147483647, %v743
        %v745 = vadd.f32 %v744, 0.0
        %v746 = vadd.f32 %v717, %v745
        %v747 = vld [vmem:[#allocation2] sm:$0xff]
        %v748 = vadd.f32 %v747, %v741
        %749 = vst [vmem:[#allocation2] sm:$0xff] %v748
        %v750 = vld [vmem:[#allocation3] sm:$0xff]
        %v751 = vadd.f32 %v750, %v746
        %vm752 = vcmask 785408
        %753 = vst.msk [vmem:[#allocation3] sm:$0xff] %vm752, %v751
        %p754 = scmp.eq.s32.totalorder %s39, 3
        // Predicated region
        $region89: #{tpu_custom_call.1} parent=51 // pred_check
          %p755 = pneg %p754
        $region90: #{tpu_custom_call.1} parent=51 // pred_check_branch
          %757 = sbr.rel (%p755) target = $region92
        $region91: #{tpu_custom_call.1} parent=51 // pred_region
          %v758 = vld [vmem:[#allocation2] sm:$0xff]
          %759 = vadd.xlane.f32.xlu0 %v758
          %v760 = vpop.xlane.xlu0 %759
          %v761 = vrot.slane %v760, 4
          %v762 = vadd.f32 %v760, %v761
          %v763 = vrot.slane %v762, 2
          %v764 = vadd.f32 %v762, %v763
          %v765 = vrot.slane %v764, 1
          %v766 = vadd.f32 %v764, %v765
          %s767 = vtos %v766
          %s768 = smul.f32 %s767, -2.8483073e-05
          %v769 = vld [vmem:[#allocation3] sm:$0xff]
          %v770 = vsel %vm752, %v769, 0.0
          %771 = vadd.xlane.f32.xlu0 %v770
          %v772 = vpop.xlane.xlu0 %771
          %v773 = vrot.slane %v772, 4
          %v774 = vadd.f32 %v772, %v773
          %v775 = vrot.slane %v774, 2
          %v776 = vadd.f32 %v774, %v775
          %v777 = vrot.slane %v776, 1
          %v778 = vadd.f32 %v776, %v777
          %s779 = vtos %v778
          %s780 = smul.f32 %s779, 7.052952e-05
          %s781 = sadd.f32 %s768, %s780
          %v782 = vstv %s781
          %vm783 = vcmask 0
          %784 = vst.msk [vmem:[%s644] sm:$0x1] %vm783, %v782
        $region92: #{tpu_custom_call.1} parent=51 // pred_fallthru
          _
        %p785 = scmp.lt.s32.totalorder %s38, 1
        %s786 = scalar_select %p785, %s38, 1
        %s787 = scalar_lea.vmem %s8, %s786
        // Predicated region
        $region93: #{tpu_custom_call.1} parent=51 // pred_check
          %p788 = pneg %p304
        $region94: #{tpu_custom_call.1} parent=51 // pred_check_branch
          %790 = sbr.rel (%p788) target = $region96
        $region95: #{tpu_custom_call.1} parent=51 // pred_region
          _
        $region96: #{tpu_custom_call.1} parent=51 // pred_fallthru
          _
      $region52: #{tpu_custom_call.1} parent=5 // pred_fallthru
        _
      %p791 = scmp.le.s32.totalorder 2, %s29
      // Predicated region
      $region97: #{tpu_custom_call.1} parent=5 // pred_check
        %p792 = pneg %p791
      $region98: #{tpu_custom_call.1} parent=5 // pred_check_branch
        %794 = sbr.rel (%p792) target = $region100
      $region99: #{tpu_custom_call.1} parent=5 // pred_region
        %s795 = ssub.s32 %s29, 2
        // Predicated region
        $region101: #{tpu_custom_call.1} parent=99 // pred_check
          %p796 = pneg %p310
        $region102: #{tpu_custom_call.1} parent=99 // pred_check_branch
          %798 = sbr.rel (%p796) target = $region104
        $region103: #{tpu_custom_call.1} parent=99 // pred_region
          %p799 = scmp.lt.s32.totalorder %s40, 1
          %s800 = scalar_select %p799, %s40, 1
          %s801 = scalar_lea.vmem %s8, %s800
        $region104: #{tpu_custom_call.1} parent=99 // pred_fallthru
          _
      $region100: #{tpu_custom_call.1} parent=5 // pred_fallthru
        _
    $region6: #{tpu_custom_call.1} parent=1 // loop_footer
      %s33 = sadd.s32 1, %s29
    $region7: #{tpu_custom_call.1} parent=1 // loop_footer_branch
      %28 = sbr.rel target = $region3
    $region8: #{tpu_custom_call.1} parent=1 // loop_exit
      _
    %802 = vsyncpa [#allocation5], 1
    %s803 = scalar_lea.sflag [#allocation5], 1
    %804 = vsyncpa %s803, 1
    %805 = vsyncpa [#allocation7], 1
    %s806 = scalar_lea.sflag [#allocation7], 1
    %807 = vsyncpa %s806, 1
    %808 = vsyncpa [#allocation10], 1
    %s809 = scalar_lea.sflag [#allocation10], 1
    %810 = vsyncpa %s809, 1
    %811 = vsyncpa [#allocation13], 1
    %s812 = scalar_lea.sflag [#allocation13], 1
    %813 = vsyncpa %s812, 1
    %814 = vsyncpa [#allocation16], 1
    %s815 = scalar_lea.sflag [#allocation16], 1
    %816 = vsyncpa %s815, 1

</llo_original>
